<compile_context>
chip_gen: v7x
topology: tpu7x:2x2x1
jax: 0.10.0
libtpu: 0.0.40
codegen_flags: <defaults>
</compile_context>

<pallas_src>
import functools
import math

import jax
import jax.numpy as jnp
from jax import lax
from jax.experimental import pallas as pl
from jax.experimental.pallas import tpu as pltpu


def _mha_kernel(x_ref, w_qkv_ref, b_qkv_ref, w_out_ref, b_out_ref, o_ref,
                *, head_count, key_dim, value_dim, masked):
    # x_ref block: (1, T, D) for the current batch element.
    x = x_ref[0]                                               # (T, D)
    T = x.shape[0]

    # Fused Q/K/V projection for ALL heads in one MXU push.
    # The 1/sqrt(key_dim) scale is pre-folded into the Q columns by the wrapper.
    qkv = jnp.dot(x, w_qkv_ref[...],
                  preferred_element_type=jnp.float32) + b_qkv_ref[...]  # (T, H*(2Kd+Vd))

    per_head = 2 * key_dim + value_dim
    head_outs = []
    for h in range(head_count):                                # static unroll, H small
        base = h * per_head
        q = qkv[:, base:base + key_dim]                        # (T, Kd), pre-scaled
        k = qkv[:, base + key_dim:base + 2 * key_dim]          # (T, Kd)
        v = qkv[:, base + 2 * key_dim:base + per_head]         # (T, Vd)

        # scores = q @ k^T without an explicit transpose of k.
        scores = lax.dot_general(
            q, k, dimension_numbers=(((1,), (1,)), ((), ())),
            preferred_element_type=jnp.float32)                # (T, T)

        if masked:
            row = lax.broadcasted_iota(jnp.int32, (T, T), 0)
            col = lax.broadcasted_iota(jnp.int32, (T, T), 1)
            # Single select, exact PyTorch semantics:
            #   tril() zeros the strict upper triangle, then every exact zero
            #   (including accidental zeros on/below the diagonal) -> -inf.
            keep = (row >= col) & (scores != 0.0)
            scores = jnp.where(keep, scores, -jnp.inf)

        # softmax along the last dim.
        m = jnp.max(scores, axis=-1, keepdims=True)
        e = jnp.exp(scores - m)
        wts = e * pl.reciprocal(jnp.sum(e, axis=-1, keepdims=True), approx=True)

        # TODO(synk): attention-weight dropout skipped (identity / eval mode).
        head_outs.append(jnp.dot(wts, v, preferred_element_type=jnp.float32))  # (T, Vd)

    # Fused per-head output projections: (T, H*Vd) @ block-diagonal (H*Vd, D)
    # -> already-concatenated (T, D) result; single lane-dense store.
    y_all = jnp.concatenate(head_outs, axis=-1)
    out = jnp.dot(y_all, w_out_ref[...],
                  preferred_element_type=jnp.float32) + b_out_ref[...]
    o_ref[0] = out.astype(o_ref.dtype)


def multi_head_attention_pallas(x, head_params, *, key_dim, value_dim, masked=True):
    """x: (B, T, D). head_params: list of per-head (wq,bq,wk,bk,wv,bv,wo,bo).

    Weight layout is (in_dim, out_dim), i.e. y = x @ W + b (equivalent to
    torch Linear's x @ W.T + b with W stored transposed).
    """
    B, T, D = x.shape
    H = len(head_params)
    scale = jnp.float32(1.0 / math.sqrt(key_dim))

    # --- Fuse per-head Q/K/V weights into one (D, H*(2Kd+Vd)) matrix. ---
    w_cols, b_cols, out_dims = [], [], []
    for (wq, bq, wk, bk, wv, bv, wo, bo) in head_params:
        w_cols += [scale * wq, wk, wv]       # fold 1/sqrt(Kd) into Q weights
        b_cols += [scale * bq, bk, bv]       # ... and Q bias
        out_dims.append(wo.shape[1])
    w_qkv = jnp.concatenate(w_cols, axis=1)                    # (D, H*(2Kd+Vd))
    b_qkv = jnp.concatenate(b_cols, axis=1)                    # (1, H*(2Kd+Vd))

    # --- Block-diagonal fused output projection (H*Vd, sum(out_dims)). ---
    total_out = sum(out_dims)
    w_out = jnp.zeros((H * value_dim, total_out), jnp.float32)
    b_parts, col = [], 0
    for h, (wq, bq, wk, bk, wv, bv, wo, bo) in enumerate(head_params):
        od = wo.shape[1]
        w_out = w_out.at[h * value_dim:(h + 1) * value_dim, col:col + od].set(wo)
        b_parts.append(bo)
        col += od
    b_out = jnp.concatenate(b_parts, axis=1)                   # (1, total_out)

    kernel = functools.partial(_mha_kernel, head_count=H, key_dim=key_dim,
                               value_dim=value_dim, masked=masked)
    full = lambda arr: pl.BlockSpec(arr.shape, lambda b: (0,) * arr.ndim)

    out = pl.pallas_call(
        kernel,
        out_shape=jax.ShapeDtypeStruct((B, T, total_out), x.dtype),
        grid=(B,),
        in_specs=[
            pl.BlockSpec((1, T, D), lambda b: (b, 0, 0)),
            full(w_qkv), full(b_qkv), full(w_out), full(b_out),
        ],
        out_specs=pl.BlockSpec((1, T, total_out), lambda b: (b, 0, 0)),
        compiler_params=pltpu.CompilerParams(
            dimension_semantics=("parallel",)),
    )(x, w_qkv, b_qkv, w_out, b_out)

    # TODO(synk): final dropout skipped (identity / eval mode).
    return out


def init_linear(key, in_dim, out_dim):
    """Mirrors torch.nn.Linear default init: U(-1/sqrt(in), 1/sqrt(in))."""
    kw, kb = jax.random.split(key)
    bound = 1.0 / math.sqrt(in_dim)
    w = jax.random.uniform(kw, (in_dim, out_dim), jnp.float32, -bound, bound)
    b = jax.random.uniform(kb, (1, out_dim), jnp.float32, -bound, bound)
    return w, b


def init_multi_head(key, head_count, input_dim, key_dim, value_dim):
    """Builds per-head parameter tuples matching MultiHeadAttention.__init__."""
    head_size = input_dim // head_count
    out_dims = [head_size] * (head_count - 1)
    out_dims.append(head_size + (input_dim - head_count * head_size))

    heads = []
    for h, od in enumerate(out_dims):
        kq, kk, kv, ko = jax.random.split(jax.random.fold_in(key, h), 4)
        wq, bq = init_linear(kq, input_dim, key_dim)
        wk, bk = init_linear(kk, input_dim, key_dim)
        wv, bv = init_linear(kv, input_dim, value_dim)
        wo, bo = init_linear(ko, value_dim, od)
        heads.append((wq, bq, wk, bk, wv, bv, wo, bo))
    return heads


if __name__ == "__main__":
    # Small shapes consistent with the module: seq=8, hidden(input_dim)=32.
    B, T, D = 2, 8, 32
    head_count, key_dim, value_dim = 3, 16, 16   # 3 heads -> out dims 10,10,12

    root = jax.random.PRNGKey(0)
    kx, kp = jax.random.split(root)
    x = jax.random.normal(kx, (B, T, D), jnp.float32)

    head_params = init_multi_head(kp, head_count, D, key_dim, value_dim)

    out = multi_head_attention_pallas(x, head_params,
                                      key_dim=key_dim, value_dim=value_dim,
                                      masked=True)
    jax.block_until_ready(out)

    assert out.shape == (B, T, D), out.shape
    print("KERNEL_OK")
</pallas_src>

<mosaic_0001>
module attributes {stable_mosaic.version = 11 : i64} {
  func.func @_mha_kernel(%arg0: i32, %arg1: memref<1x8x32xf32, #tpu.memory_space<vmem>>, %arg2: memref<32x144xf32, #tpu.memory_space<vmem>>, %arg3: memref<1x144xf32, #tpu.memory_space<vmem>>, %arg4: memref<48x32xf32, #tpu.memory_space<vmem>>, %arg5: memref<1x32xf32, #tpu.memory_space<vmem>>, %arg6: memref<1x8x32xf32, #tpu.memory_space<vmem>>) attributes {dimension_semantics = [#tpu.dimension_semantics<parallel>], iteration_bounds = array<i64: 2>, scalar_prefetch = 0 : i64, scratch_operands = 0 : i64, tpu.core_type = #tpu.core_type<tc>, window_params = [{transform_indices = @transform_0, window_bounds = array<i64: 1, 8, 32>}, {pipeline_mode = #tpu.pipeline_mode<synchronous>, transform_indices = @transform_1, window_bounds = array<i64: 32, 144>}, {pipeline_mode = #tpu.pipeline_mode<synchronous>, transform_indices = @transform_2, window_bounds = array<i64: 1, 144>}, {pipeline_mode = #tpu.pipeline_mode<synchronous>, transform_indices = @transform_3, window_bounds = array<i64: 48, 32>}, {pipeline_mode = #tpu.pipeline_mode<synchronous>, transform_indices = @transform_4, window_bounds = array<i64: 1, 32>}, {transform_indices = @transform_5, window_bounds = array<i64: 1, 8, 32>}]} {
    %c0 = arith.constant 0 : index
    %c0_0 = arith.constant 0 : index
    %c0_1 = arith.constant 0 : index
    %0 = vector.load %arg1[%c0, %c0_0, %c0_1] : memref<1x8x32xf32, #tpu.memory_space<vmem>>, vector<1x8x32xf32>
    %1 = vector.shape_cast %0 : vector<1x8x32xf32> to vector<8x32xf32>
    %c0_2 = arith.constant 0 : index
    %c0_3 = arith.constant 0 : index
    %2 = vector.load %arg2[%c0_2, %c0_3] : memref<32x144xf32, #tpu.memory_space<vmem>>, vector<32x144xf32>
    %cst = arith.constant dense<0.000000e+00> : vector<8x144xf32>
    %3 = tpu.matmul %1, %2, %cst {dimension_numbers = #tpu.dot_dimension_numbers<[1], [0], [0], [1], [0, 0, 1, 1], [], []>} : vector<8x32xf32>, vector<32x144xf32>, vector<8x144xf32> -> vector<8x144xf32>
    %c0_4 = arith.constant 0 : index
    %c0_5 = arith.constant 0 : index
    %4 = vector.load %arg3[%c0_4, %c0_5] : memref<1x144xf32, #tpu.memory_space<vmem>>, vector<1x144xf32>
    %5 = vector.broadcast %4 : vector<1x144xf32> to vector<8x144xf32>
    %6 = arith.addf %3, %5 : vector<8x144xf32>
    %7 = vector.extract_strided_slice %6 {offsets = [0, 0], sizes = [8, 16], strides = [1, 1]} : vector<8x144xf32> to vector<8x16xf32>
    %8 = vector.extract_strided_slice %6 {offsets = [0, 16], sizes = [8, 16], strides = [1, 1]} : vector<8x144xf32> to vector<8x16xf32>
    %9 = vector.extract_strided_slice %6 {offsets = [0, 32], sizes = [8, 16], strides = [1, 1]} : vector<8x144xf32> to vector<8x16xf32>
    %cst_6 = arith.constant dense<0.000000e+00> : vector<8x8xf32>
    %10 = tpu.matmul %7, %8, %cst_6 {dimension_numbers = #tpu.dot_dimension_numbers<[1], [1], [0], [0], [0, 0, 1, 0], [], []>} : vector<8x16xf32>, vector<8x16xf32>, vector<8x8xf32> -> vector<8x8xf32>
    %11 = tpu.iota {dimensions = array<i32: 0>} : vector<8x8xi32>
    %12 = tpu.iota {dimensions = array<i32: 1>} : vector<8x8xi32>
    %13 = arith.cmpi sge, %11, %12 : vector<8x8xi32>
    %cst_7 = arith.constant 0.000000e+00 : f32
    %14 = vector.broadcast %cst_7 : f32 to vector<8x8xf32>
    %15 = arith.cmpf one, %10, %14 : vector<8x8xf32>
    %16 = arith.andi %13, %15 : vector<8x8xi1>
    %cst_8 = arith.constant 0xFF800000 : f32
    %17 = vector.broadcast %cst_8 : f32 to vector<8x8xf32>
    %18 = arith.select %16, %10, %17 : vector<8x8xi1>, vector<8x8xf32>
    %cst_9 = arith.constant dense<0xFF800000> : vector<8xf32>
    %19 = vector.multi_reduction <maximumf>, %18, %cst_9 [1] : vector<8x8xf32> to vector<8xf32>
    %20 = vector.shape_cast %19 : vector<8xf32> to vector<8x1xf32>
    %21 = vector.broadcast %20 : vector<8x1xf32> to vector<8x8xf32>
    %22 = arith.subf %18, %21 : vector<8x8xf32>
    %23 = math.exp %22 : vector<8x8xf32>
    %cst_10 = arith.constant dense<0.000000e+00> : vector<8xf32>
    %24 = vector.multi_reduction <add>, %23, %cst_10 [1] : vector<8x8xf32> to vector<8xf32>
    %25 = vector.shape_cast %24 : vector<8xf32> to vector<8x1xf32>
    %26 = tpu.reciprocal %25 {approx = true} : vector<8x1xf32> -> vector<8x1xf32>
    %27 = vector.broadcast %26 : vector<8x1xf32> to vector<8x8xf32>
    %28 = arith.mulf %23, %27 : vector<8x8xf32>
    %cst_11 = arith.constant dense<0.000000e+00> : vector<8x16xf32>
    %29 = tpu.matmul %28, %9, %cst_11 {dimension_numbers = #tpu.dot_dimension_numbers<[1], [0], [0], [1], [0, 0, 1, 1], [], []>} : vector<8x8xf32>, vector<8x16xf32>, vector<8x16xf32> -> vector<8x16xf32>
    %30 = vector.extract_strided_slice %6 {offsets = [0, 48], sizes = [8, 16], strides = [1, 1]} : vector<8x144xf32> to vector<8x16xf32>
    %31 = vector.extract_strided_slice %6 {offsets = [0, 64], sizes = [8, 16], strides = [1, 1]} : vector<8x144xf32> to vector<8x16xf32>
    %32 = vector.extract_strided_slice %6 {offsets = [0, 80], sizes = [8, 16], strides = [1, 1]} : vector<8x144xf32> to vector<8x16xf32>
    %cst_12 = arith.constant dense<0.000000e+00> : vector<8x8xf32>
    %33 = tpu.matmul %30, %31, %cst_12 {dimension_numbers = #tpu.dot_dimension_numbers<[1], [1], [0], [0], [0, 0, 1, 0], [], []>} : vector<8x16xf32>, vector<8x16xf32>, vector<8x8xf32> -> vector<8x8xf32>
    %34 = tpu.iota {dimensions = array<i32: 0>} : vector<8x8xi32>
    %35 = tpu.iota {dimensions = array<i32: 1>} : vector<8x8xi32>
    %36 = arith.cmpi sge, %34, %35 : vector<8x8xi32>
    %cst_13 = arith.constant 0.000000e+00 : f32
    %37 = vector.broadcast %cst_13 : f32 to vector<8x8xf32>
    %38 = arith.cmpf one, %33, %37 : vector<8x8xf32>
    %39 = arith.andi %36, %38 : vector<8x8xi1>
    %cst_14 = arith.constant 0xFF800000 : f32
    %40 = vector.broadcast %cst_14 : f32 to vector<8x8xf32>
    %41 = arith.select %39, %33, %40 : vector<8x8xi1>, vector<8x8xf32>
    %cst_15 = arith.constant dense<0xFF800000> : vector<8xf32>
    %42 = vector.multi_reduction <maximumf>, %41, %cst_15 [1] : vector<8x8xf32> to vector<8xf32>
    %43 = vector.shape_cast %42 : vector<8xf32> to vector<8x1xf32>
    %44 = vector.broadcast %43 : vector<8x1xf32> to vector<8x8xf32>
    %45 = arith.subf %41, %44 : vector<8x8xf32>
    %46 = math.exp %45 : vector<8x8xf32>
    %cst_16 = arith.constant dense<0.000000e+00> : vector<8xf32>
    %47 = vector.multi_reduction <add>, %46, %cst_16 [1] : vector<8x8xf32> to vector<8xf32>
    %48 = vector.shape_cast %47 : vector<8xf32> to vector<8x1xf32>
    %49 = tpu.reciprocal %48 {approx = true} : vector<8x1xf32> -> vector<8x1xf32>
    %50 = vector.broadcast %49 : vector<8x1xf32> to vector<8x8xf32>
    %51 = arith.mulf %46, %50 : vector<8x8xf32>
    %cst_17 = arith.constant dense<0.000000e+00> : vector<8x16xf32>
    %52 = tpu.matmul %51, %32, %cst_17 {dimension_numbers = #tpu.dot_dimension_numbers<[1], [0], [0], [1], [0, 0, 1, 1], [], []>} : vector<8x8xf32>, vector<8x16xf32>, vector<8x16xf32> -> vector<8x16xf32>
    %53 = vector.extract_strided_slice %6 {offsets = [0, 96], sizes = [8, 16], strides = [1, 1]} : vector<8x144xf32> to vector<8x16xf32>
    %54 = vector.extract_strided_slice %6 {offsets = [0, 112], sizes = [8, 16], strides = [1, 1]} : vector<8x144xf32> to vector<8x16xf32>
    %55 = vector.extract_strided_slice %6 {offsets = [0, 128], sizes = [8, 16], strides = [1, 1]} : vector<8x144xf32> to vector<8x16xf32>
    %cst_18 = arith.constant dense<0.000000e+00> : vector<8x8xf32>
    %56 = tpu.matmul %53, %54, %cst_18 {dimension_numbers = #tpu.dot_dimension_numbers<[1], [1], [0], [0], [0, 0, 1, 0], [], []>} : vector<8x16xf32>, vector<8x16xf32>, vector<8x8xf32> -> vector<8x8xf32>
    %57 = tpu.iota {dimensions = array<i32: 0>} : vector<8x8xi32>
    %58 = tpu.iota {dimensions = array<i32: 1>} : vector<8x8xi32>
    %59 = arith.cmpi sge, %57, %58 : vector<8x8xi32>
    %cst_19 = arith.constant 0.000000e+00 : f32
    %60 = vector.broadcast %cst_19 : f32 to vector<8x8xf32>
    %61 = arith.cmpf one, %56, %60 : vector<8x8xf32>
    %62 = arith.andi %59, %61 : vector<8x8xi1>
    %cst_20 = arith.constant 0xFF800000 : f32
    %63 = vector.broadcast %cst_20 : f32 to vector<8x8xf32>
    %64 = arith.select %62, %56, %63 : vector<8x8xi1>, vector<8x8xf32>
    %cst_21 = arith.constant dense<0xFF800000> : vector<8xf32>
    %65 = vector.multi_reduction <maximumf>, %64, %cst_21 [1] : vector<8x8xf32> to vector<8xf32>
    %66 = vector.shape_cast %65 : vector<8xf32> to vector<8x1xf32>
    %67 = vector.broadcast %66 : vector<8x1xf32> to vector<8x8xf32>
    %68 = arith.subf %64, %67 : vector<8x8xf32>
    %69 = math.exp %68 : vector<8x8xf32>
    %cst_22 = arith.constant dense<0.000000e+00> : vector<8xf32>
    %70 = vector.multi_reduction <add>, %69, %cst_22 [1] : vector<8x8xf32> to vector<8xf32>
    %71 = vector.shape_cast %70 : vector<8xf32> to vector<8x1xf32>
    %72 = tpu.reciprocal %71 {approx = true} : vector<8x1xf32> -> vector<8x1xf32>
    %73 = vector.broadcast %72 : vector<8x1xf32> to vector<8x8xf32>
    %74 = arith.mulf %69, %73 : vector<8x8xf32>
    %cst_23 = arith.constant dense<0.000000e+00> : vector<8x16xf32>
    %75 = tpu.matmul %74, %55, %cst_23 {dimension_numbers = #tpu.dot_dimension_numbers<[1], [0], [0], [1], [0, 0, 1, 1], [], []>} : vector<8x8xf32>, vector<8x16xf32>, vector<8x16xf32> -> vector<8x16xf32>
    %76 = tpu.concatenate %29, %52, %75 in 1 : vector<8x16xf32>, vector<8x16xf32>, vector<8x16xf32> -> vector<8x48xf32>
    %c0_24 = arith.constant 0 : index
    %c0_25 = arith.constant 0 : index
    %77 = vector.load %arg4[%c0_24, %c0_25] : memref<48x32xf32, #tpu.memory_space<vmem>>, vector<48x32xf32>
    %cst_26 = arith.constant dense<0.000000e+00> : vector<8x32xf32>
    %78 = tpu.matmul %76, %77, %cst_26 {dimension_numbers = #tpu.dot_dimension_numbers<[1], [0], [0], [1], [0, 0, 1, 1], [], []>} : vector<8x48xf32>, vector<48x32xf32>, vector<8x32xf32> -> vector<8x32xf32>
    %c0_27 = arith.constant 0 : index
    %c0_28 = arith.constant 0 : index
    %79 = vector.load %arg5[%c0_27, %c0_28] : memref<1x32xf32, #tpu.memory_space<vmem>>, vector<1x32xf32>
    %80 = vector.broadcast %79 : vector<1x32xf32> to vector<8x32xf32>
    %81 = arith.addf %78, %80 : vector<8x32xf32>
    %c0_29 = arith.constant 0 : index
    %c0_30 = arith.constant 0 : index
    %c0_31 = arith.constant 0 : index
    %82 = vector.load %arg6[%c0_29, %c0_30, %c0_31] : memref<1x8x32xf32, #tpu.memory_space<vmem>>, vector<1x8x32xf32>
    %83 = vector.shape_cast %82 : vector<1x8x32xf32> to vector<8x32xf32>
    %84 = vector.shape_cast %81 : vector<8x32xf32> to vector<1x8x32xf32>
    tpu.vector_store %arg6[%c0_29, %c0_30, %c0_31], %84 {strides = array<i32>} : memref<1x8x32xf32, #tpu.memory_space<vmem>>, vector<1x8x32xf32>,
    return
  }
  func.func @transform_0(%arg0: i32) -> (i32, i32, i32) {
    %c0_i32 = arith.constant 0 : i32
    %c0_i32_0 = arith.constant 0 : i32
    %c0_i32_1 = arith.constant 0 : i32
    return %arg0, %c0_i32, %c0_i32_0 : i32, i32, i32
  }
  func.func @transform_1(%arg0: i32) -> (i32, i32) {
    %c0_i32 = arith.constant 0 : i32
    %c0_i32_0 = arith.constant 0 : i32
    %c0_i32_1 = arith.constant 0 : i32
    return %c0_i32, %c0_i32_0 : i32, i32
  }
  func.func @transform_2(%arg0: i32) -> (i32, i32) {
    %c0_i32 = arith.constant 0 : i32
    %c0_i32_0 = arith.constant 0 : i32
    %c0_i32_1 = arith.constant 0 : i32
    return %c0_i32, %c0_i32_0 : i32, i32
  }
  func.func @transform_3(%arg0: i32) -> (i32, i32) {
    %c0_i32 = arith.constant 0 : i32
    %c0_i32_0 = arith.constant 0 : i32
    %c0_i32_1 = arith.constant 0 : i32
    return %c0_i32, %c0_i32_0 : i32, i32
  }
  func.func @transform_4(%arg0: i32) -> (i32, i32) {
    %c0_i32 = arith.constant 0 : i32
    %c0_i32_0 = arith.constant 0 : i32
    %c0_i32_1 = arith.constant 0 : i32
    return %c0_i32, %c0_i32_0 : i32, i32
  }
  func.func @transform_5(%arg0: i32) -> (i32, i32, i32) {
    %c0_i32 = arith.constant 0 : i32
    %c0_i32_0 = arith.constant 0 : i32
    %c0_i32_1 = arith.constant 0 : i32
    return %arg0, %c0_i32, %c0_i32_0 : i32, i32, i32
  }
}

</mosaic_0001>

<llo_original>
// kernel: tpu_custom_call.1
$region0: #{tpu_custom_call.1}
  #allocation0 [shape = 'u32[]', space=smem, size = 0x4, offset = 0x4, fixed_abs, tag = 'smem constant byte address 0x4 - core index']
  #allocation1 [shape = 'u32[144,128]{1,0:T(1,128)}', space=vmem, size = 0x12000, scoped, tag = 'internal scratch']
  %s0 = inlined_call_operand.vmem [shape: f32[2,8,32], index: 0, kind: input, shape index: {}]
  %s1 = inlined_call_operand.vmem [shape: f32[32,144], index: 1, kind: input, shape index: {}]
  %s2 = inlined_call_operand.vmem [shape: f32[1,144], index: 2, kind: input, shape index: {}]
  %s3 = inlined_call_operand.vmem [shape: f32[48,32], index: 3, kind: input, shape index: {}]
  %s4 = inlined_call_operand.vmem [shape: f32[1,32], index: 4, kind: input, shape index: {}]
  %s5 = inlined_call_operand.hbm [shape: f32[2,8,32], index: 5, kind: output, shape index: {}]
  %s6 = sld [smem:[#allocation0]]
  $region53: #{tpu_custom_call.1} parent=0
    _
  %s8 = ssub.s32 1, %s6
  %s9 = scalar_select 0, %s8, %s6
  $region1: #{tpu_custom_call.1} parent=0
    #allocation2 [shape = 'u8[8192]{0}', space=vmem, size = 0x2000, scoped, tag = 'output window, operand 0']
    #allocation3 [shape = 's32[2]{0}', space=sflag, size = 0x8, scoped, tag = 'scoped memory for tpu_custom_call.1']
    %10 = vsyncpa [#allocation3], 0
    %s11 = scalar_lea.sflag [#allocation3], 1
    %12 = vsyncpa %s11, 0
    loop: start=0, step=1, limit=4
    $region2: #{tpu_custom_call.1} parent=1 // loop_pre_header
      _
    $region3: #{tpu_custom_call.1} parent=1 // loop_header
      %s14 = sphi 0, %s18
      %p15 = scmp.ge.s32.totalorder %s14, 4
      %s24 = sphi 0, %s26
      %s27 = sphi 0, %s24
      %s28 = sphi 0, %s27
      %s44 = sphi 0, %s28
      %s48 = sphi 0, %s48
      %s50 = sphi 0, %s48
      %s51 = sphi 0, %s50
      %s65 = sphi 0, %s51
      %s69 = sphi 0, %s69
      %s71 = sphi 0, %s69
      %s72 = sphi 0, %s71
      %s86 = sphi 0, %s72
      %s90 = sphi 0, %s90
      %s92 = sphi 0, %s90
      %s93 = sphi 0, %s92
      %s107 = sphi 0, %s93
      %s111 = sphi 0, %s111
      %s113 = sphi 0, %s111
      %s114 = sphi 0, %s113
      %s128 = sphi 0, %s114
      %s134 = sphi 0, %s136
      %s137 = sphi 0, %s134
      %s138 = sphi 0, %s137
      %s154 = sphi 0, %s138
    $region4: #{tpu_custom_call.1} parent=1 // loop_header_branch
      %17 = sbr.rel (%p15) target = $region8
    $region5: #{tpu_custom_call.1} parent=1 // loop_body
      %s19 = ssub.s32 %s14, 1
      %s20 = ssub.s32 %s14, 2
      %s21 = sadd.s32 %s14, 1
      %s22 = ssub.s32 %s14, %s21
      %p23 = scmp.eq.s32.totalorder %s22, 0
      %s25 = sadd.s32 %s24, 1
      %s26 = scalar_select %p23, %s24, %s25
      %p29 = pneg %p23
      %p30 = scmp.eq.s32.totalorder %s14, 1
      %p31 = por %p29, %p30
      %p32 = scmp.ne.s32.totalorder %s24, %s27
      %p33 = scmp.eq.s32.totalorder %s14, 0
      %p34 = por %p32, %p33
      %p35 = scmp.ne.s32.totalorder %s24, %s27
      %p36 = scmp.eq.s32.totalorder %s19, 1
      %p37 = por %p35, %p36
      %p38 = scmp.ne.s32.totalorder %s27, %s28
      %p39 = scmp.eq.s32.totalorder %s19, 0
      %p40 = por %p38, %p39
      %p41 = scmp.ne.s32.totalorder %s27, %s28
      %p42 = scmp.eq.s32.totalorder %s20, 1
      %p43 = por %p41, %p42
      %p45 = scmp.ne.s32.totalorder %s28, %s44
      %p46 = scmp.eq.s32.totalorder %s20, 0
      %p47 = por %p45, %p46
      %s49 = sadd.s32 %s48, 1
      %p52 = scmp.eq.s32.totalorder %s14, 1
      %p53 = scmp.ne.s32.totalorder %s48, %s50
      %p54 = scmp.eq.s32.totalorder %s14, 0
      %p55 = por %p53, %p54
      %p56 = scmp.ne.s32.totalorder %s48, %s50
      %p57 = scmp.eq.s32.totalorder %s19, 1
      %p58 = por %p56, %p57
      %p59 = scmp.ne.s32.totalorder %s50, %s51
      %p60 = scmp.eq.s32.totalorder %s19, 0
      %p61 = por %p59, %p60
      %p62 = scmp.ne.s32.totalorder %s50, %s51
      %p63 = scmp.eq.s32.totalorder %s20, 1
      %p64 = por %p62, %p63
      %p66 = scmp.ne.s32.totalorder %s51, %s65
      %p67 = scmp.eq.s32.totalorder %s20, 0
      %p68 = por %p66, %p67
      %s70 = sadd.s32 %s69, 1
      %p73 = scmp.eq.s32.totalorder %s14, 1
      %p74 = scmp.ne.s32.totalorder %s69, %s71
      %p75 = scmp.eq.s32.totalorder %s14, 0
      %p76 = por %p74, %p75
      %p77 = scmp.ne.s32.totalorder %s69, %s71
      %p78 = scmp.eq.s32.totalorder %s19, 1
      %p79 = por %p77, %p78
      %p80 = scmp.ne.s32.totalorder %s71, %s72
      %p81 = scmp.eq.s32.totalorder %s19, 0
      %p82 = por %p80, %p81
      %p83 = scmp.ne.s32.totalorder %s71, %s72
      %p84 = scmp.eq.s32.totalorder %s20, 1
      %p85 = por %p83, %p84
      %p87 = scmp.ne.s32.totalorder %s72, %s86
      %p88 = scmp.eq.s32.totalorder %s20, 0
      %p89 = por %p87, %p88
      %s91 = sadd.s32 %s90, 1
      %p94 = scmp.eq.s32.totalorder %s14, 1
      %p95 = scmp.ne.s32.totalorder %s90, %s92
      %p96 = scmp.eq.s32.totalorder %s14, 0
      %p97 = por %p95, %p96
      %p98 = scmp.ne.s32.totalorder %s90, %s92
      %p99 = scmp.eq.s32.totalorder %s19, 1
      %p100 = por %p98, %p99
      %p101 = scmp.ne.s32.totalorder %s92, %s93
      %p102 = scmp.eq.s32.totalorder %s19, 0
      %p103 = por %p101, %p102
      %p104 = scmp.ne.s32.totalorder %s92, %s93
      %p105 = scmp.eq.s32.totalorder %s20, 1
      %p106 = por %p104, %p105
      %p108 = scmp.ne.s32.totalorder %s93, %s107
      %p109 = scmp.eq.s32.totalorder %s20, 0
      %p110 = por %p108, %p109
      %s112 = sadd.s32 %s111, 1
      %p115 = scmp.eq.s32.totalorder %s14, 1
      %p116 = scmp.ne.s32.totalorder %s111, %s113
      %p117 = scmp.eq.s32.totalorder %s14, 0
      %p118 = por %p116, %p117
      %p119 = scmp.ne.s32.totalorder %s111, %s113
      %p120 = scmp.eq.s32.totalorder %s19, 1
      %p121 = por %p119, %p120
      %p122 = scmp.ne.s32.totalorder %s113, %s114
      %p123 = scmp.eq.s32.totalorder %s19, 0
      %p124 = por %p122, %p123
      %p125 = scmp.ne.s32.totalorder %s113, %s114
      %p126 = scmp.eq.s32.totalorder %s20, 1
      %p127 = por %p125, %p126
      %p129 = scmp.ne.s32.totalorder %s114, %s128
      %p130 = scmp.eq.s32.totalorder %s20, 0
      %p131 = por %p129, %p130
      %s132 = ssub.s32 %s14, %s21
      %p133 = scmp.eq.s32.totalorder %s132, 0
      %s135 = sadd.s32 %s134, 1
      %s136 = scalar_select %p133, %s134, %s135
      %p139 = pneg %p133
      %p140 = scmp.eq.s32.totalorder %s14, 1
      %p141 = por %p139, %p140
      %p142 = scmp.ne.s32.totalorder %s134, %s137
      %p143 = scmp.eq.s32.totalorder %s14, 0
      %p144 = por %p142, %p143
      %p145 = scmp.ne.s32.totalorder %s134, %s137
      %p146 = scmp.eq.s32.totalorder %s19, 1
      %p147 = por %p145, %p146
      %p148 = scmp.ne.s32.totalorder %s137, %s138
      %p149 = scmp.eq.s32.totalorder %s19, 0
      %p150 = por %p148, %p149
      %p151 = scmp.ne.s32.totalorder %s137, %s138
      %p152 = scmp.eq.s32.totalorder %s20, 1
      %p153 = por %p151, %p152
      %p155 = scmp.ne.s32.totalorder %s138, %s154
      %p156 = scmp.eq.s32.totalorder %s20, 0
      %p157 = por %p155, %p156
      %p158 = scmp.le.s32.totalorder 1, %s14
      %p159 = scmp.lt.s32.totalorder %s14, 3
      %p160 = pnand %p158, %p159
      %p161 = pneg %p160
      // Predicated region
      $region9: #{tpu_custom_call.1} parent=5 // pred_check
        _
      $region10: #{tpu_custom_call.1} parent=5 // pred_check_branch
        %163 = sbr.rel (%p160) target = $region12
      $region11: #{tpu_custom_call.1} parent=5 // pred_region
        %s164 = ssub.s32 %s14, 1
        // Predicated region
        $region13: #{tpu_custom_call.1} parent=11 // pred_check
          %p165 = pneg %p61
        $region14: #{tpu_custom_call.1} parent=11 // pred_check_branch
          %167 = sbr.rel (%p165) target = $region16
        $region15: #{tpu_custom_call.1} parent=11 // pred_region
          _
        $region16: #{tpu_custom_call.1} parent=11 // pred_fallthru
          _
        // Predicated region
        $region17: #{tpu_custom_call.1} parent=11 // pred_check
          %p168 = pneg %p82
        $region18: #{tpu_custom_call.1} parent=11 // pred_check_branch
          %170 = sbr.rel (%p168) target = $region20
        $region19: #{tpu_custom_call.1} parent=11 // pred_region
          _
        $region20: #{tpu_custom_call.1} parent=11 // pred_fallthru
          _
        // Predicated region
        $region21: #{tpu_custom_call.1} parent=11 // pred_check
          %p171 = pneg %p103
        $region22: #{tpu_custom_call.1} parent=11 // pred_check_branch
          %173 = sbr.rel (%p171) target = $region24
        $region23: #{tpu_custom_call.1} parent=11 // pred_region
          _
        $region24: #{tpu_custom_call.1} parent=11 // pred_fallthru
          _
        // Predicated region
        $region25: #{tpu_custom_call.1} parent=11 // pred_check
          %p174 = pneg %p124
        $region26: #{tpu_custom_call.1} parent=11 // pred_check_branch
          %176 = sbr.rel (%p174) target = $region28
        $region27: #{tpu_custom_call.1} parent=11 // pred_region
          _
        $region28: #{tpu_custom_call.1} parent=11 // pred_fallthru
          _
      $region12: #{tpu_custom_call.1} parent=5 // pred_fallthru
        _
      %p177 = scmp.lt.s32.totalorder %s14, 2
      // Predicated region
      $region29: #{tpu_custom_call.1} parent=5 // pred_check
        %p178 = pneg %p177
      $region30: #{tpu_custom_call.1} parent=5 // pred_check_branch
        %180 = sbr.rel (%p178) target = $region32
      $region31: #{tpu_custom_call.1} parent=5 // pred_region
        // Predicated region
        $region33: #{tpu_custom_call.1} parent=31 // pred_check
          %p181 = pneg %p34
        $region34: #{tpu_custom_call.1} parent=31 // pred_check_branch
          %183 = sbr.rel (%p181) target = $region36
        $region35: #{tpu_custom_call.1} parent=31 // pred_region
          %p184 = scmp.lt.s32.totalorder %s14, 1
          %s185 = scalar_select %p184, %s14, 1
          %s186 = smul.addr %s185, 8
          %s187 = scalar_lea.vmem %s0, %s186
        $region36: #{tpu_custom_call.1} parent=31 // pred_fallthru
          _
      $region32: #{tpu_custom_call.1} parent=5 // pred_fallthru
        _
      %p188 = scmp.le.s32.totalorder 1, %s14
      %p189 = scmp.lt.s32.totalorder %s14, 3
      %p190 = pnand %p188, %p189
      %p191 = pneg %p190
      // Predicated region
      $region37: #{tpu_custom_call.1} parent=5 // pred_check
        _
      $region38: #{tpu_custom_call.1} parent=5 // pred_check_branch
        %193 = sbr.rel (%p190) target = $region40
      $region39: #{tpu_custom_call.1} parent=5 // pred_region
        %s194 = ssub.s32 %s14, 1
        %p195 = scmp.lt.s32.totalorder %s19, 1
        %s196 = scalar_select %p195, %s19, 1
        %s197 = smul.addr %s196, 8
        %s198 = scalar_lea.vmem %s0, %s197
        %p199 = pneg %p40
        %p200 = pneg %p37
        %p201 = pneg %p61
        %p202 = pneg %p58
        %p203 = pneg %p82
        %p204 = pneg %p79
        %p205 = pneg %p103
        %p206 = pneg %p100
        %p207 = pneg %p124
        %p208 = pneg %p121
        %p209 = pneg %p150
        %p210 = pneg %p147
        %s211 = sand.u32 %s137, 1
        %s212 = scalar_lea.sflag [#allocation3], %s211
        %s213 = sand.u32 %s137, 1
        %s214 = smul.addr %s213, 8
        %s215 = scalar_lea.vmem [#allocation2], %s214
        %p216 = scmp.lt.s32.totalorder %s19, 1
        %s217 = scalar_select %p216, %s19, 1
        %s218 = smul.addr %s217, 8
        %s219 = scalar_lea.vmem %s0, %s218
        %v220 = vld [vmem:[%s219] sm:$0xff]
        %v221 = vld [vmem:[%s1] sm:$0xff]
        %v222 = vld [vmem:[%s1 + $0x8] sm:$0xff]
        %v223 = vld [vmem:[%s1 + $0x10] sm:$0xff]
        %v224 = vld [vmem:[%s1 + $0x18] sm:$0xff]
        %v225 = vld [vmem:[%s1 + $0x20] sm:$0xff]
        %v226 = vld [vmem:[%s1 + $0x28] sm:$0xff]
        %v227 = vld [vmem:[%s1 + $0x30] sm:$0xff]
        %v228 = vld [vmem:[%s1 + $0x38] sm:$0xff]
        %v229 = vld [vmem:[%s2] sm:$0x3]
        %v231 = vlaneseq
        %v232 = vshrl.u32 %v231, 7
        %v233 = vsub.s32 0, %v232
        %v234 = vrot.slane %v229, %v233
        %v235 = vlaneseq
        %v236 = vshrl.u32 %v235, 7
        %v237 = vsub.s32 1, %v236
        %v238 = vrot.slane %v229, %v237
        %vm241 = vcmask 261120
        %v243 = vsel %vm241, %v220, 0
        %245 = vmatprep.subr.mxu0 %v222
        %246 = vmatpush1.msra.mxu0 %v221
        %247 = vmatprep.subr.mxu0 %v224
        %248 = vmatpush1.msra.mxu0 %v223
        %249 = vmatprep.subr.mxu0 %v226
        %250 = vmatpush1.msra.mxu0 %v225
        %251 = vmatprep.subr.mxu0 %v228
        %252 = vmatpush1.msra.mxu0 %v227
        %253 = vmatprep.subr.mxu0 0.0
        %254 = vmatpush1.msra.mxu0 0.0
        %255 = vmatprep.subr.mxu0 0.0
        %256 = vmatpush1.msra.mxu0 0.0
        %257 = vmatprep.subr.mxu0 0.0
        %258 = vmatpush1.msra.mxu0 0.0
        %259 = vmatprep.subr.mxu0 0.0
        %260 = vmatpush1.msra.mxu0 0.0
        %261 = vmatprep.subr.mxu0 0.0
        %262 = vmatpush1.msra.mxu0 0.0
        %263 = vmatprep.subr.mxu0 0.0
        %264 = vmatpush1.msra.mxu0 0.0
        %265 = vmatprep.subr.mxu0 0.0
        %266 = vmatpush1.msra.mxu0 0.0
        %267 = vmatprep.subr.mxu0 0.0
        %268 = vmatpush1.msra.mxu0 0.0
        %269 = vmatprep.subr.mxu0 0.0
        %270 = vmatpush1.msra.mxu0 0.0
        %271 = vmatprep.subr.mxu0 0.0
        %272 = vmatpush1.msra.mxu0 0.0
        %273 = vmatprep.subr.mxu0 0.0
        %274 = vmatpush1.msra.mxu0 0.0
        %275 = vmatprep.subr.mxu0 0.0
        %276 = vmatpush1.msra.mxu0 0.0
        %277 = vmatprep.subr.mxu0 0.0
        %278 = vmatpush1.msra.mxu0 0.0
        %279 = vmatprep.subr.mxu0 0.0
        %280 = vmatpush1.msra.mxu0 0.0
        %281 = vmatprep.subr.mxu0 0.0
        %282 = vmatpush1.msra.mxu0 0.0
        %283 = vmatprep.subr.mxu0 0.0
        %284 = vmatpush1.msra.mxu0 0.0
        %285 = vmatprep.subr.mxu0 0.0
        %286 = vmatpush1.msra.mxu0 0.0
        %287 = vmatprep.subr.mxu0 0.0
        %288 = vmatpush1.msra.mxu0 0.0
        %289 = vmatprep.subr.mxu0 0.0
        %290 = vmatpush1.msra.mxu0 0.0
        %291 = vmatprep.subr.mxu0 0.0
        %292 = vmatpush1.msra.mxu0 0.0
        %293 = vmatprep.subr.mxu0 0.0
        %294 = vmatpush1.msra.mxu0 0.0
        %295 = vmatprep.subr.mxu0 0.0
        %296 = vmatpush1.msra.mxu0 0.0
        %297 = vmatprep.subr.mxu0 0.0
        %298 = vmatpush1.msra.mxu0 0.0
        %299 = vmatprep.subr.mxu0 0.0
        %300 = vmatpush1.msra.mxu0 0.0
        %301 = vmatprep.subr.mxu0 0.0
        %302 = vmatpush1.msra.mxu0 0.0
        %303 = vmatprep.subr.mxu0 0.0
        %304 = vmatpush1.msra.mxu0 0.0
        %305 = vmatprep.subr.mxu0 0.0
        %306 = vmatpush1.msra.mxu0 0.0
        %307 = vmatprep.subr.mxu0 0.0
        %308 = vmatpush1.msra.mxu0 0.0
        %309 = vmatprep.mubr.f32.mxu0 0.0
        %310 = vmatmul.mubr.f32.gmra.mrb[0].mxu0 %v243
        %v311 = vpop.f32.mrb[0].mxu0
        %v312 = vadd.f32 %v234, %v311
        %v313 = vpop.f32.mrb[0].mxu0
        %v314 = vadd.f32 %v238, %v313
        %315 = vdwg.mxu0
        %317 = vrot.lane.b32.xlu0 %v312, 112
        %v318 = vpop.permute.xlu0 %317
        %vm319 = vcmask 130048
        %v320 = vsel %vm319, %v312, 0
        %v322 = vsel %vm319, %v318, 0
        %324 = vmatprep.subr.mxu0 0.0
        %325 = vmatpush1.xpose.msra.mxu0 %v322
        %326 = vmatprep.subr.mxu0 0.0
        %327 = vmatpush1.xpose.msra.mxu0 0.0
        %328 = vmatprep.subr.mxu0 0.0
        %329 = vmatpush1.xpose.msra.mxu0 0.0
        %330 = vmatprep.subr.mxu0 0.0
        %331 = vmatpush1.xpose.msra.mxu0 0.0
        %332 = vmatprep.subr.mxu0 0.0
        %333 = vmatpush1.xpose.msra.mxu0 0.0
        %334 = vmatprep.subr.mxu0 0.0
        %335 = vmatpush1.xpose.msra.mxu0 0.0
        %336 = vmatprep.subr.mxu0 0.0
        %337 = vmatpush1.xpose.msra.mxu0 0.0
        %338 = vmatprep.subr.mxu0 0.0
        %339 = vmatpush1.xpose.msra.mxu0 0.0
        %340 = vmatprep.subr.mxu0 0.0
        %341 = vmatpush1.xpose.msra.mxu0 0.0
        %342 = vmatprep.subr.mxu0 0.0
        %343 = vmatpush1.xpose.msra.mxu0 0.0
        %344 = vmatprep.subr.mxu0 0.0
        %345 = vmatpush1.xpose.msra.mxu0 0.0
        %346 = vmatprep.subr.mxu0 0.0
        %347 = vmatpush1.xpose.msra.mxu0 0.0
        %348 = vmatprep.subr.mxu0 0.0
        %349 = vmatpush1.xpose.msra.mxu0 0.0
        %350 = vmatprep.subr.mxu0 0.0
        %351 = vmatpush1.xpose.msra.mxu0 0.0
        %352 = vmatprep.subr.mxu0 0.0
        %353 = vmatpush1.xpose.msra.mxu0 0.0
        %354 = vmatprep.subr.mxu0 0.0
        %355 = vmatpush1.xpose.msra.mxu0 0.0
        %356 = vmatprep.subr.mxu0 0.0
        %357 = vmatpush1.xpose.msra.mxu0 0.0
        %358 = vmatprep.subr.mxu0 0.0
        %359 = vmatpush1.xpose.msra.mxu0 0.0
        %360 = vmatprep.subr.mxu0 0.0
        %361 = vmatpush1.xpose.msra.mxu0 0.0
        %362 = vmatprep.subr.mxu0 0.0
        %363 = vmatpush1.xpose.msra.mxu0 0.0
        %364 = vmatprep.subr.mxu0 0.0
        %365 = vmatpush1.xpose.msra.mxu0 0.0
        %366 = vmatprep.subr.mxu0 0.0
        %367 = vmatpush1.xpose.msra.mxu0 0.0
        %368 = vmatprep.subr.mxu0 0.0
        %369 = vmatpush1.xpose.msra.mxu0 0.0
        %370 = vmatprep.subr.mxu0 0.0
        %371 = vmatpush1.xpose.msra.mxu0 0.0
        %372 = vmatprep.subr.mxu0 0.0
        %373 = vmatpush1.xpose.msra.mxu0 0.0
        %374 = vmatprep.subr.mxu0 0.0
        %375 = vmatpush1.xpose.msra.mxu0 0.0
        %376 = vmatprep.subr.mxu0 0.0
        %377 = vmatpush1.xpose.msra.mxu0 0.0
        %378 = vmatprep.subr.mxu0 0.0
        %379 = vmatpush1.xpose.msra.mxu0 0.0
        %380 = vmatprep.subr.mxu0 0.0
        %381 = vmatpush1.xpose.msra.mxu0 0.0
        %382 = vmatprep.subr.mxu0 0.0
        %383 = vmatpush1.xpose.msra.mxu0 0.0
        %384 = vmatprep.subr.mxu0 0.0
        %385 = vmatpush1.xpose.msra.mxu0 0.0
        %386 = vmatprep.subr.mxu0 0.0
        %387 = vmatpush1.xpose.msra.mxu0 0.0
        %388 = vmatprep.mubr.f32.mxu0 0.0
        %389 = vmatmul.mubr.f32.gmra.mrb[0].mxu0 %v320
        %v390 = vpop.f32.mrb[0].mxu0
        %v391 = vadd.f32 0.0, %v390
        %v392 = vpop.f32.mrb[0].mxu0
        %393 = vdwg.mxu0
        %v394 = vlaneseq
        %v395 = vshrl.u32 %v394, 7
        %v396 = vlaneseq
        %v397 = vand.u32 %v396, 127
        %vm398 = vcmp.ge.s32.totalorder %v395, %v397
        %vm399 = vcmp.ne.f32.partialorder %v391, 0.0
        %vm400 = vmand %vm398, %vm399
        %v401 = vsel %vm400, %v391, -inf
        %vm402 = vcmask 64512
        %v403 = vsel %vm402, %v401, -inf
        %404 = vmax.xlane.f32.xlu0 %v403
        %v405 = vpop.xlane.xlu0 %404
        %v406 = vsub.f32 %v401, %v405
        %v407 = vmul.f32 %v406, 1.442695
        %v408 = vpow.pop %v407
        %v409 = vsel %vm402, %v408, 0.0
        %410 = vadd.xlane.f32.xlu0 %v409
        %v411 = vpop.xlane.xlu0 %410
        %v412 = vrcp.pop %v411
        %v413 = vmul.f32 %v408, %v412
        %414 = vrot.lane.b32.xlu0 %v312, 96
        %v415 = vpop.permute.xlu0 %414
        %v418 = vsel %vm402, %v413, 0
        %420 = vmatprep.subr.mxu0 0.0
        %421 = vmatpush1.msra.mxu0 %v415
        %422 = vmatprep.subr.mxu0 0.0
        %423 = vmatpush1.msra.mxu0 0.0
        %424 = vmatprep.subr.mxu0 0.0
        %425 = vmatpush1.msra.mxu0 0.0
        %426 = vmatprep.subr.mxu0 0.0
        %427 = vmatpush1.msra.mxu0 0.0
        %428 = vmatprep.subr.mxu0 0.0
        %429 = vmatpush1.msra.mxu0 0.0
        %430 = vmatprep.subr.mxu0 0.0
        %431 = vmatpush1.msra.mxu0 0.0
        %432 = vmatprep.subr.mxu0 0.0
        %433 = vmatpush1.msra.mxu0 0.0
        %434 = vmatprep.subr.mxu0 0.0
        %435 = vmatpush1.msra.mxu0 0.0
        %436 = vmatprep.subr.mxu0 0.0
        %437 = vmatpush1.msra.mxu0 0.0
        %438 = vmatprep.subr.mxu0 0.0
        %439 = vmatpush1.msra.mxu0 0.0
        %440 = vmatprep.subr.mxu0 0.0
        %441 = vmatpush1.msra.mxu0 0.0
        %442 = vmatprep.subr.mxu0 0.0
        %443 = vmatpush1.msra.mxu0 0.0
        %444 = vmatprep.subr.mxu0 0.0
        %445 = vmatpush1.msra.mxu0 0.0
        %446 = vmatprep.subr.mxu0 0.0
        %447 = vmatpush1.msra.mxu0 0.0
        %448 = vmatprep.subr.mxu0 0.0
        %449 = vmatpush1.msra.mxu0 0.0
        %450 = vmatprep.subr.mxu0 0.0
        %451 = vmatpush1.msra.mxu0 0.0
        %452 = vmatprep.subr.mxu0 0.0
        %453 = vmatpush1.msra.mxu0 0.0
        %454 = vmatprep.subr.mxu0 0.0
        %455 = vmatpush1.msra.mxu0 0.0
        %456 = vmatprep.subr.mxu0 0.0
        %457 = vmatpush1.msra.mxu0 0.0
        %458 = vmatprep.subr.mxu0 0.0
        %459 = vmatpush1.msra.mxu0 0.0
        %460 = vmatprep.subr.mxu0 0.0
        %461 = vmatpush1.msra.mxu0 0.0
        %462 = vmatprep.subr.mxu0 0.0
        %463 = vmatpush1.msra.mxu0 0.0
        %464 = vmatprep.subr.mxu0 0.0
        %465 = vmatpush1.msra.mxu0 0.0
        %466 = vmatprep.subr.mxu0 0.0
        %467 = vmatpush1.msra.mxu0 0.0
        %468 = vmatprep.subr.mxu0 0.0
        %469 = vmatpush1.msra.mxu0 0.0
        %470 = vmatprep.subr.mxu0 0.0
        %471 = vmatpush1.msra.mxu0 0.0
        %472 = vmatprep.subr.mxu0 0.0
        %473 = vmatpush1.msra.mxu0 0.0
        %474 = vmatprep.subr.mxu0 0.0
        %475 = vmatpush1.msra.mxu0 0.0
        %476 = vmatprep.subr.mxu0 0.0
        %477 = vmatpush1.msra.mxu0 0.0
        %478 = vmatprep.subr.mxu0 0.0
        %479 = vmatpush1.msra.mxu0 0.0
        %480 = vmatprep.subr.mxu0 0.0
        %481 = vmatpush1.msra.mxu0 0.0
        %482 = vmatprep.subr.mxu0 0.0
        %483 = vmatpush1.msra.mxu0 0.0
        %484 = vmatprep.mubr.f32.mxu0 0.0
        %485 = vmatmul.mubr.f32.gmra.mrb[0].mxu0 %v418
        %v486 = vpop.f32.mrb[0].mxu0
        %v487 = vadd.f32 0.0, %v486
        %v488 = vpop.f32.mrb[0].mxu0
        %489 = vdwg.mxu0
        %490 = vrot.lane.b32.xlu0 %v312, 80
        %v491 = vpop.permute.xlu0 %490
        %492 = vrot.lane.b32.xlu0 %v312, 64
        %v493 = vpop.permute.xlu0 %492
        %v494 = vsel %vm319, %v491, 0
        %v496 = vsel %vm319, %v493, 0
        %498 = vmatprep.subr.mxu0 0.0
        %499 = vmatpush1.xpose.msra.mxu0 %v496
        %500 = vmatprep.subr.mxu0 0.0
        %501 = vmatpush1.xpose.msra.mxu0 0.0
        %502 = vmatprep.subr.mxu0 0.0
        %503 = vmatpush1.xpose.msra.mxu0 0.0
        %504 = vmatprep.subr.mxu0 0.0
        %505 = vmatpush1.xpose.msra.mxu0 0.0
        %506 = vmatprep.subr.mxu0 0.0
        %507 = vmatpush1.xpose.msra.mxu0 0.0
        %508 = vmatprep.subr.mxu0 0.0
        %509 = vmatpush1.xpose.msra.mxu0 0.0
        %510 = vmatprep.subr.mxu0 0.0
        %511 = vmatpush1.xpose.msra.mxu0 0.0
        %512 = vmatprep.subr.mxu0 0.0
        %513 = vmatpush1.xpose.msra.mxu0 0.0
        %514 = vmatprep.subr.mxu0 0.0
        %515 = vmatpush1.xpose.msra.mxu0 0.0
        %516 = vmatprep.subr.mxu0 0.0
        %517 = vmatpush1.xpose.msra.mxu0 0.0
        %518 = vmatprep.subr.mxu0 0.0
        %519 = vmatpush1.xpose.msra.mxu0 0.0
        %520 = vmatprep.subr.mxu0 0.0
        %521 = vmatpush1.xpose.msra.mxu0 0.0
        %522 = vmatprep.subr.mxu0 0.0
        %523 = vmatpush1.xpose.msra.mxu0 0.0
        %524 = vmatprep.subr.mxu0 0.0
        %525 = vmatpush1.xpose.msra.mxu0 0.0
        %526 = vmatprep.subr.mxu0 0.0
        %527 = vmatpush1.xpose.msra.mxu0 0.0
        %528 = vmatprep.subr.mxu0 0.0
        %529 = vmatpush1.xpose.msra.mxu0 0.0
        %530 = vmatprep.subr.mxu0 0.0
        %531 = vmatpush1.xpose.msra.mxu0 0.0
        %532 = vmatprep.subr.mxu0 0.0
        %533 = vmatpush1.xpose.msra.mxu0 0.0
        %534 = vmatprep.subr.mxu0 0.0
        %535 = vmatpush1.xpose.msra.mxu0 0.0
        %536 = vmatprep.subr.mxu0 0.0
        %537 = vmatpush1.xpose.msra.mxu0 0.0
        %538 = vmatprep.subr.mxu0 0.0
        %539 = vmatpush1.xpose.msra.mxu0 0.0
        %540 = vmatprep.subr.mxu0 0.0
        %541 = vmatpush1.xpose.msra.mxu0 0.0
        %542 = vmatprep.subr.mxu0 0.0
        %543 = vmatpush1.xpose.msra.mxu0 0.0
        %544 = vmatprep.subr.mxu0 0.0
        %545 = vmatpush1.xpose.msra.mxu0 0.0
        %546 = vmatprep.subr.mxu0 0.0
        %547 = vmatpush1.xpose.msra.mxu0 0.0
        %548 = vmatprep.subr.mxu0 0.0
        %549 = vmatpush1.xpose.msra.mxu0 0.0
        %550 = vmatprep.subr.mxu0 0.0
        %551 = vmatpush1.xpose.msra.mxu0 0.0
        %552 = vmatprep.subr.mxu0 0.0
        %553 = vmatpush1.xpose.msra.mxu0 0.0
        %554 = vmatprep.subr.mxu0 0.0
        %555 = vmatpush1.xpose.msra.mxu0 0.0
        %556 = vmatprep.subr.mxu0 0.0
        %557 = vmatpush1.xpose.msra.mxu0 0.0
        %558 = vmatprep.subr.mxu0 0.0
        %559 = vmatpush1.xpose.msra.mxu0 0.0
        %560 = vmatprep.subr.mxu0 0.0
        %561 = vmatpush1.xpose.msra.mxu0 0.0
        %562 = vmatprep.mubr.f32.mxu0 0.0
        %563 = vmatmul.mubr.f32.gmra.mrb[0].mxu0 %v494
        %v564 = vpop.f32.mrb[0].mxu0
        %v565 = vadd.f32 0.0, %v564
        %v566 = vpop.f32.mrb[0].mxu0
        %567 = vdwg.mxu0
        %vm568 = vcmp.ne.f32.partialorder %v565, 0.0
        %vm569 = vmand %vm398, %vm568
        %v570 = vsel %vm569, %v565, -inf
        %v571 = vsel %vm402, %v570, -inf
        %572 = vmax.xlane.f32.xlu0 %v571
        %v573 = vpop.xlane.xlu0 %572
        %v574 = vsub.f32 %v570, %v573
        %v575 = vmul.f32 %v574, 1.442695
        %v576 = vpow.pop %v575
        %v577 = vsel %vm402, %v576, 0.0
        %578 = vadd.xlane.f32.xlu0 %v577
        %v579 = vpop.xlane.xlu0 %578
        %v580 = vrcp.pop %v579
        %v581 = vmul.f32 %v576, %v580
        %582 = vrot.lane.b32.xlu0 %v312, 48
        %v583 = vpop.permute.xlu0 %582
        %v586 = vsel %vm402, %v581, 0
        %588 = vmatprep.subr.mxu0 0.0
        %589 = vmatpush1.msra.mxu0 %v583
        %590 = vmatprep.subr.mxu0 0.0
        %591 = vmatpush1.msra.mxu0 0.0
        %592 = vmatprep.subr.mxu0 0.0
        %593 = vmatpush1.msra.mxu0 0.0
        %594 = vmatprep.subr.mxu0 0.0
        %595 = vmatpush1.msra.mxu0 0.0
        %596 = vmatprep.subr.mxu0 0.0
        %597 = vmatpush1.msra.mxu0 0.0
        %598 = vmatprep.subr.mxu0 0.0
        %599 = vmatpush1.msra.mxu0 0.0
        %600 = vmatprep.subr.mxu0 0.0
        %601 = vmatpush1.msra.mxu0 0.0
        %602 = vmatprep.subr.mxu0 0.0
        %603 = vmatpush1.msra.mxu0 0.0
        %604 = vmatprep.subr.mxu0 0.0
        %605 = vmatpush1.msra.mxu0 0.0
        %606 = vmatprep.subr.mxu0 0.0
        %607 = vmatpush1.msra.mxu0 0.0
        %608 = vmatprep.subr.mxu0 0.0
        %609 = vmatpush1.msra.mxu0 0.0
        %610 = vmatprep.subr.mxu0 0.0
        %611 = vmatpush1.msra.mxu0 0.0
        %612 = vmatprep.subr.mxu0 0.0
        %613 = vmatpush1.msra.mxu0 0.0
        %614 = vmatprep.subr.mxu0 0.0
        %615 = vmatpush1.msra.mxu0 0.0
        %616 = vmatprep.subr.mxu0 0.0
        %617 = vmatpush1.msra.mxu0 0.0
        %618 = vmatprep.subr.mxu0 0.0
        %619 = vmatpush1.msra.mxu0 0.0
        %620 = vmatprep.subr.mxu0 0.0
        %621 = vmatpush1.msra.mxu0 0.0
        %622 = vmatprep.subr.mxu0 0.0
        %623 = vmatpush1.msra.mxu0 0.0
        %624 = vmatprep.subr.mxu0 0.0
        %625 = vmatpush1.msra.mxu0 0.0
        %626 = vmatprep.subr.mxu0 0.0
        %627 = vmatpush1.msra.mxu0 0.0
        %628 = vmatprep.subr.mxu0 0.0
        %629 = vmatpush1.msra.mxu0 0.0
        %630 = vmatprep.subr.mxu0 0.0
        %631 = vmatpush1.msra.mxu0 0.0
        %632 = vmatprep.subr.mxu0 0.0
        %633 = vmatpush1.msra.mxu0 0.0
        %634 = vmatprep.subr.mxu0 0.0
        %635 = vmatpush1.msra.mxu0 0.0
        %636 = vmatprep.subr.mxu0 0.0
        %637 = vmatpush1.msra.mxu0 0.0
        %638 = vmatprep.subr.mxu0 0.0
        %639 = vmatpush1.msra.mxu0 0.0
        %640 = vmatprep.subr.mxu0 0.0
        %641 = vmatpush1.msra.mxu0 0.0
        %642 = vmatprep.subr.mxu0 0.0
        %643 = vmatpush1.msra.mxu0 0.0
        %644 = vmatprep.subr.mxu0 0.0
        %645 = vmatpush1.msra.mxu0 0.0
        %646 = vmatprep.subr.mxu0 0.0
        %647 = vmatpush1.msra.mxu0 0.0
        %648 = vmatprep.subr.mxu0 0.0
        %649 = vmatpush1.msra.mxu0 0.0
        %650 = vmatprep.subr.mxu0 0.0
        %651 = vmatpush1.msra.mxu0 0.0
        %652 = vmatprep.mubr.f32.mxu0 0.0
        %653 = vmatmul.mubr.f32.gmra.mrb[0].mxu0 %v586
        %v654 = vpop.f32.mrb[0].mxu0
        %v655 = vadd.f32 0.0, %v654
        %v656 = vpop.f32.mrb[0].mxu0
        %657 = vdwg.mxu0
        %658 = vrot.lane.b32.xlu0 %v312, 32
        %v659 = vpop.permute.xlu0 %658
        %660 = vrot.lane.b32.xlu0 %v312, 16
        %v661 = vpop.permute.xlu0 %660
        %v662 = vsel %vm319, %v659, 0
        %v664 = vsel %vm319, %v661, 0
        %666 = vmatprep.subr.mxu0 0.0
        %667 = vmatpush1.xpose.msra.mxu0 %v664
        %668 = vmatprep.subr.mxu0 0.0
        %669 = vmatpush1.xpose.msra.mxu0 0.0
        %670 = vmatprep.subr.mxu0 0.0
        %671 = vmatpush1.xpose.msra.mxu0 0.0
        %672 = vmatprep.subr.mxu0 0.0
        %673 = vmatpush1.xpose.msra.mxu0 0.0
        %674 = vmatprep.subr.mxu0 0.0
        %675 = vmatpush1.xpose.msra.mxu0 0.0
        %676 = vmatprep.subr.mxu0 0.0
        %677 = vmatpush1.xpose.msra.mxu0 0.0
        %678 = vmatprep.subr.mxu0 0.0
        %679 = vmatpush1.xpose.msra.mxu0 0.0
        %680 = vmatprep.subr.mxu0 0.0
        %681 = vmatpush1.xpose.msra.mxu0 0.0
        %682 = vmatprep.subr.mxu0 0.0
        %683 = vmatpush1.xpose.msra.mxu0 0.0
        %684 = vmatprep.subr.mxu0 0.0
        %685 = vmatpush1.xpose.msra.mxu0 0.0
        %686 = vmatprep.subr.mxu0 0.0
        %687 = vmatpush1.xpose.msra.mxu0 0.0
        %688 = vmatprep.subr.mxu0 0.0
        %689 = vmatpush1.xpose.msra.mxu0 0.0
        %690 = vmatprep.subr.mxu0 0.0
        %691 = vmatpush1.xpose.msra.mxu0 0.0
        %692 = vmatprep.subr.mxu0 0.0
        %693 = vmatpush1.xpose.msra.mxu0 0.0
        %694 = vmatprep.subr.mxu0 0.0
        %695 = vmatpush1.xpose.msra.mxu0 0.0
        %696 = vmatprep.subr.mxu0 0.0
        %697 = vmatpush1.xpose.msra.mxu0 0.0
        %698 = vmatprep.subr.mxu0 0.0
        %699 = vmatpush1.xpose.msra.mxu0 0.0
        %700 = vmatprep.subr.mxu0 0.0
        %701 = vmatpush1.xpose.msra.mxu0 0.0
        %702 = vmatprep.subr.mxu0 0.0
        %703 = vmatpush1.xpose.msra.mxu0 0.0
        %704 = vmatprep.subr.mxu0 0.0
        %705 = vmatpush1.xpose.msra.mxu0 0.0
        %706 = vmatprep.subr.mxu0 0.0
        %707 = vmatpush1.xpose.msra.mxu0 0.0
        %708 = vmatprep.subr.mxu0 0.0
        %709 = vmatpush1.xpose.msra.mxu0 0.0
        %710 = vmatprep.subr.mxu0 0.0
        %711 = vmatpush1.xpose.msra.mxu0 0.0
        %712 = vmatprep.subr.mxu0 0.0
        %713 = vmatpush1.xpose.msra.mxu0 0.0
        %714 = vmatprep.subr.mxu0 0.0
        %715 = vmatpush1.xpose.msra.mxu0 0.0
        %716 = vmatprep.subr.mxu0 0.0
        %717 = vmatpush1.xpose.msra.mxu0 0.0
        %718 = vmatprep.subr.mxu0 0.0
        %719 = vmatpush1.xpose.msra.mxu0 0.0
        %720 = vmatprep.subr.mxu0 0.0
        %721 = vmatpush1.xpose.msra.mxu0 0.0
        %722 = vmatprep.subr.mxu0 0.0
        %723 = vmatpush1.xpose.msra.mxu0 0.0
        %724 = vmatprep.subr.mxu0 0.0
        %725 = vmatpush1.xpose.msra.mxu0 0.0
        %726 = vmatprep.subr.mxu0 0.0
        %727 = vmatpush1.xpose.msra.mxu0 0.0
        %728 = vmatprep.subr.mxu0 0.0
        %729 = vmatpush1.xpose.msra.mxu0 0.0
        %730 = vmatprep.mubr.f32.mxu0 0.0
        %731 = vmatmul.mubr.f32.gmra.mrb[0].mxu0 %v662
        %v732 = vpop.f32.mrb[0].mxu0
        %v733 = vadd.f32 0.0, %v732
        %v734 = vpop.f32.mrb[0].mxu0
        %735 = vdwg.mxu0
        %vm736 = vcmp.ne.f32.partialorder %v733, 0.0
        %vm737 = vmand %vm398, %vm736
        %v738 = vsel %vm737, %v733, -inf
        %v739 = vsel %vm402, %v738, -inf
        %740 = vmax.xlane.f32.xlu0 %v739
        %v741 = vpop.xlane.xlu0 %740
        %v742 = vsub.f32 %v738, %v741
        %v743 = vmul.f32 %v742, 1.442695
        %v744 = vpow.pop %v743
        %v745 = vsel %vm402, %v744, 0.0
        %746 = vadd.xlane.f32.xlu0 %v745
        %v747 = vpop.xlane.xlu0 %746
        %v748 = vrcp.pop %v747
        %v749 = vmul.f32 %v744, %v748
        %v751 = vsel %vm402, %v749, 0
        %753 = vmatprep.subr.mxu0 0.0
        %754 = vmatpush1.msra.mxu0 %v314
        %755 = vmatprep.subr.mxu0 0.0
        %756 = vmatpush1.msra.mxu0 0.0
        %757 = vmatprep.subr.mxu0 0.0
        %758 = vmatpush1.msra.mxu0 0.0
        %759 = vmatprep.subr.mxu0 0.0
        %760 = vmatpush1.msra.mxu0 0.0
        %761 = vmatprep.subr.mxu0 0.0
        %762 = vmatpush1.msra.mxu0 0.0
        %763 = vmatprep.subr.mxu0 0.0
        %764 = vmatpush1.msra.mxu0 0.0
        %765 = vmatprep.subr.mxu0 0.0
        %766 = vmatpush1.msra.mxu0 0.0
        %767 = vmatprep.subr.mxu0 0.0
        %768 = vmatpush1.msra.mxu0 0.0
        %769 = vmatprep.subr.mxu0 0.0
        %770 = vmatpush1.msra.mxu0 0.0
        %771 = vmatprep.subr.mxu0 0.0
        %772 = vmatpush1.msra.mxu0 0.0
        %773 = vmatprep.subr.mxu0 0.0
        %774 = vmatpush1.msra.mxu0 0.0
        %775 = vmatprep.subr.mxu0 0.0
        %776 = vmatpush1.msra.mxu0 0.0
        %777 = vmatprep.subr.mxu0 0.0
        %778 = vmatpush1.msra.mxu0 0.0
        %779 = vmatprep.subr.mxu0 0.0
        %780 = vmatpush1.msra.mxu0 0.0
        %781 = vmatprep.subr.mxu0 0.0
        %782 = vmatpush1.msra.mxu0 0.0
        %783 = vmatprep.subr.mxu0 0.0
        %784 = vmatpush1.msra.mxu0 0.0
        %785 = vmatprep.subr.mxu0 0.0
        %786 = vmatpush1.msra.mxu0 0.0
        %787 = vmatprep.subr.mxu0 0.0
        %788 = vmatpush1.msra.mxu0 0.0
        %789 = vmatprep.subr.mxu0 0.0
        %790 = vmatpush1.msra.mxu0 0.0
        %791 = vmatprep.subr.mxu0 0.0
        %792 = vmatpush1.msra.mxu0 0.0
        %793 = vmatprep.subr.mxu0 0.0
        %794 = vmatpush1.msra.mxu0 0.0
        %795 = vmatprep.subr.mxu0 0.0
        %796 = vmatpush1.msra.mxu0 0.0
        %797 = vmatprep.subr.mxu0 0.0
        %798 = vmatpush1.msra.mxu0 0.0
        %799 = vmatprep.subr.mxu0 0.0
        %800 = vmatpush1.msra.mxu0 0.0
        %801 = vmatprep.subr.mxu0 0.0
        %802 = vmatpush1.msra.mxu0 0.0
        %803 = vmatprep.subr.mxu0 0.0
        %804 = vmatpush1.msra.mxu0 0.0
        %805 = vmatprep.subr.mxu0 0.0
        %806 = vmatpush1.msra.mxu0 0.0
        %807 = vmatprep.subr.mxu0 0.0
        %808 = vmatpush1.msra.mxu0 0.0
        %809 = vmatprep.subr.mxu0 0.0
        %810 = vmatpush1.msra.mxu0 0.0
        %811 = vmatprep.subr.mxu0 0.0
        %812 = vmatpush1.msra.mxu0 0.0
        %813 = vmatprep.subr.mxu0 0.0
        %814 = vmatpush1.msra.mxu0 0.0
        %815 = vmatprep.subr.mxu0 0.0
        %816 = vmatpush1.msra.mxu0 0.0
        %817 = vmatprep.mubr.f32.mxu0 0.0
        %818 = vmatmul.mubr.f32.gmra.mrb[0].mxu0 %v751
        %v819 = vpop.f32.mrb[0].mxu0
        %v820 = vadd.f32 0.0, %v819
        %v821 = vpop.f32.mrb[0].mxu0
        %822 = vdwg.mxu0
        %824 = vrot.lane.b32.xlu0 %v655, 16
        %v825 = vpop.permute.xlu0 %824
        %828 = vrot.lane.b32.xlu0 %v820, 32
        %v829 = vpop.permute.xlu0 %828
        %v831 = vsel %vm319, %v487, %v825
        %v832 = vsel %vm241, %v831, %v829
        %v833 = vld [vmem:[%s3] sm:$0xff]
        %v834 = vld [vmem:[%s3 + $0x8] sm:$0xff]
        %v835 = vld [vmem:[%s3 + $0x10] sm:$0xff]
        %v836 = vld [vmem:[%s3 + $0x18] sm:$0xff]
        %v837 = vld [vmem:[%s3 + $0x20] sm:$0xff]
        %v838 = vld [vmem:[%s3 + $0x28] sm:$0xff]
        %v839 = vld [vmem:[%s4] sm:$0x1]
        %v841 = vlaneseq
        %v842 = vshrl.u32 %v841, 7
        %v843 = vsub.s32 0, %v842
        %v844 = vrot.slane %v839, %v843
        %vm846 = vcmask 392192
        %v848 = vsel %vm846, %v832, 0
        %850 = vmatprep.subr.mxu0 0.0
        %851 = vmatpush1.msra.mxu0 %v833
        %852 = vmatprep.subr.mxu0 0.0
        %853 = vmatpush1.msra.mxu0 %v834
        %854 = vmatprep.subr.mxu0 0.0
        %855 = vmatpush1.msra.mxu0 %v835
        %856 = vmatprep.subr.mxu0 0.0
        %857 = vmatpush1.msra.mxu0 %v836
        %858 = vmatprep.subr.mxu0 0.0
        %859 = vmatpush1.msra.mxu0 %v837
        %860 = vmatprep.subr.mxu0 0.0
        %861 = vmatpush1.msra.mxu0 %v838
        %862 = vmatprep.subr.mxu0 0.0
        %863 = vmatpush1.msra.mxu0 0.0
        %864 = vmatprep.subr.mxu0 0.0
        %865 = vmatpush1.msra.mxu0 0.0
        %866 = vmatprep.subr.mxu0 0.0
        %867 = vmatpush1.msra.mxu0 0.0
        %868 = vmatprep.subr.mxu0 0.0
        %869 = vmatpush1.msra.mxu0 0.0
        %870 = vmatprep.subr.mxu0 0.0
        %871 = vmatpush1.msra.mxu0 0.0
        %872 = vmatprep.subr.mxu0 0.0
        %873 = vmatpush1.msra.mxu0 0.0
        %874 = vmatprep.subr.mxu0 0.0
        %875 = vmatpush1.msra.mxu0 0.0
        %876 = vmatprep.subr.mxu0 0.0
        %877 = vmatpush1.msra.mxu0 0.0
        %878 = vmatprep.subr.mxu0 0.0
        %879 = vmatpush1.msra.mxu0 0.0
        %880 = vmatprep.subr.mxu0 0.0
        %881 = vmatpush1.msra.mxu0 0.0
        %882 = vmatprep.subr.mxu0 0.0
        %883 = vmatpush1.msra.mxu0 0.0
        %884 = vmatprep.subr.mxu0 0.0
        %885 = vmatpush1.msra.mxu0 0.0
        %886 = vmatprep.subr.mxu0 0.0
        %887 = vmatpush1.msra.mxu0 0.0
        %888 = vmatprep.subr.mxu0 0.0
        %889 = vmatpush1.msra.mxu0 0.0
        %890 = vmatprep.subr.mxu0 0.0
        %891 = vmatpush1.msra.mxu0 0.0
        %892 = vmatprep.subr.mxu0 0.0
        %893 = vmatpush1.msra.mxu0 0.0
        %894 = vmatprep.subr.mxu0 0.0
        %895 = vmatpush1.msra.mxu0 0.0
        %896 = vmatprep.subr.mxu0 0.0
        %897 = vmatpush1.msra.mxu0 0.0
        %898 = vmatprep.subr.mxu0 0.0
        %899 = vmatpush1.msra.mxu0 0.0
        %900 = vmatprep.subr.mxu0 0.0
        %901 = vmatpush1.msra.mxu0 0.0
        %902 = vmatprep.subr.mxu0 0.0
        %903 = vmatpush1.msra.mxu0 0.0
        %904 = vmatprep.subr.mxu0 0.0
        %905 = vmatpush1.msra.mxu0 0.0
        %906 = vmatprep.subr.mxu0 0.0
        %907 = vmatpush1.msra.mxu0 0.0
        %908 = vmatprep.subr.mxu0 0.0
        %909 = vmatpush1.msra.mxu0 0.0
        %910 = vmatprep.subr.mxu0 0.0
        %911 = vmatpush1.msra.mxu0 0.0
        %912 = vmatprep.subr.mxu0 0.0
        %913 = vmatpush1.msra.mxu0 0.0
        %914 = vmatprep.mubr.f32.mxu0 0.0
        %915 = vmatmul.mubr.f32.gmra.mrb[0].mxu0 %v848
        %v916 = vpop.f32.mrb[0].mxu0
        %v917 = vadd.f32 %v844, %v916
        %v918 = vpop.f32.mrb[0].mxu0
        %919 = vdwg.mxu0
        %920 = vst.msk [vmem:[%s215] sm:$0xff] %vm241, %v917
        %s921 = sand.u32 %s137, 1
        %s922 = scalar_lea.sflag [#allocation3], %s921
        %s923 = sand.u32 %s137, 1
        %s924 = smul.addr %s923, 8
        %s925 = scalar_lea.vmem [#allocation2], %s924
        // Predicated region
        $region41: #{tpu_custom_call.1} parent=39 // pred_check
          %p926 = pneg %p147
        $region42: #{tpu_custom_call.1} parent=39 // pred_check_branch
          %928 = sbr.rel (%p926) target = $region44
        $region43: #{tpu_custom_call.1} parent=39 // pred_region
          %s930 = ssub.s32 128, 128
          %931 = vsyncadd %s922, %s930
          %s932 = smul.addr %s19, 128
          %s933 = scalar_lea.hbm %s5, %s932
          %s935 = sshll.u32 %s925, 4
          %s936 = int_to_ptr.vmem [resolvable:$true] %s935
          %938 = dma.vmem_to_hbm [thread:$0]  %s936, 128, %s933, %s922
        $region44: #{tpu_custom_call.1} parent=39 // pred_fallthru
          _
      $region40: #{tpu_custom_call.1} parent=5 // pred_fallthru
        _
      %p939 = scmp.le.s32.totalorder 2, %s14
      // Predicated region
      $region45: #{tpu_custom_call.1} parent=5 // pred_check
        %p940 = pneg %p939
      $region46: #{tpu_custom_call.1} parent=5 // pred_check_branch
        %942 = sbr.rel (%p940) target = $region48
      $region47: #{tpu_custom_call.1} parent=5 // pred_region
        %s943 = ssub.s32 %s14, 2
        // Predicated region
        $region49: #{tpu_custom_call.1} parent=47 // pred_check
          %p944 = pneg %p153
        $region50: #{tpu_custom_call.1} parent=47 // pred_check_branch
          %946 = sbr.rel (%p944) target = $region52
        $region51: #{tpu_custom_call.1} parent=47 // pred_region
          %s947 = sand.u32 %s138, 1
          %s948 = scalar_lea.sflag [#allocation3], %s947
          %s949 = sand.u32 %s138, 1
          %s950 = smul.addr %s949, 8
          %s951 = scalar_lea.vmem [#allocation2], %s950
          %952 = dma.done %s948, 128
        $region52: #{tpu_custom_call.1} parent=47 // pred_fallthru
          _
      $region48: #{tpu_custom_call.1} parent=5 // pred_fallthru
        _
    $region6: #{tpu_custom_call.1} parent=1 // loop_footer
      %s18 = sadd.s32 1, %s14
    $region7: #{tpu_custom_call.1} parent=1 // loop_footer_branch
      %13 = sbr.rel target = $region3
    $region8: #{tpu_custom_call.1} parent=1 // loop_exit
      _
    %953 = vsyncpa [#allocation3], 1
    %s954 = scalar_lea.sflag [#allocation3], 1
    %955 = vsyncpa %s954, 1

</llo_original>
